<compile_context>
chip_gen: v5e
topology: v5e:2x2
jax: 0.10.0
libtpu: 0.0.40
codegen_flags: <defaults>
</compile_context>

<pallas_src>
import functools

import jax
import jax.numpy as jnp
from jax.experimental import pallas as pl
from jax.experimental.pallas import tpu as pltpu


# ----------------------------- in-kernel helpers -----------------------------

def _shifted_inf(x, idx, s, axis):
    """y[i] = x[i + s] along `axis`; positions with i + s outside [0, L) -> +inf.

    Implemented as an XLU rotate (pltpu.roll, jnp.roll semantics) plus a
    boundary mask, so the plane keeps its shape (no concat/slice relayouts).
    """
    L = x.shape[axis]
    if s == 0:
        return x
    # jnp.roll semantics: roll(x, a)[i] = x[(i - a) % L]  =>  a = -s gives x[i+s].
    rolled = pltpu.roll(x, (-s) % L, axis)
    if s > 0:
        valid = idx < (L - s)
    else:
        valid = idx >= (-s)
    return jnp.where(valid, rolled, jnp.float32(jnp.inf))


def _sliding_min_axis(x, ksize, axis):
    """Centered sliding-window min of odd width `ksize` along `axis` of a 2-D plane.

    Out-of-bounds samples are treated as +inf, which is exactly equivalent to
    ReflectionPad2d((ksize-1)//2) followed by a valid-window min.  Uses
    log-doubling rolls: O(log ksize) roll+mask+min steps (7 each for ksize=15),
    split into a forward part (offsets 0..p) and a backward part (-p..-1) so
    that masking intermediate shifts with +inf stays exact.
    """
    p = (ksize - 1) // 2
    if p == 0:
        return x
    idx = jax.lax.broadcasted_iota(jnp.int32, x.shape, axis)

    # Forward: min over offsets [0, p]  (window width p + 1).
    fwd = x
    cover = 1
    while cover < p + 1:
        s = min(cover, p + 1 - cover)
        fwd = jnp.minimum(fwd, _shifted_inf(fwd, idx, s, axis))
        cover += s

    # Backward: min over offsets [-p, -1]  (window width p).
    bwd = _shifted_inf(x, idx, -1, axis)
    cover = 1
    while cover < p:
        s = min(cover, p - cover)
        bwd = jnp.minimum(bwd, _shifted_inf(bwd, idx, -s, axis))
        cover += s

    return jnp.minimum(fwd, bwd)


def _dark_map_block(x, ksize):
    """x: (C, H, W) in [-1, 1] (any float dtype) -> (H, W) f32 dark-channel map."""
    # Channel min in the input dtype (min is exact), then one plane-sized cast.
    dark = jnp.min(x, axis=0).astype(jnp.float32)            # (H, W)
    dark = _sliding_min_axis(dark, ksize, axis=0)            # rows (sublanes)
    dark = _sliding_min_axis(dark, ksize, axis=1)            # cols (lanes)
    # (v+1)*0.5 and the clamp are monotone -> applied once, after both mins.
    return jnp.clip((dark + 1.0) * 0.5, 0.0, 0.1)


# --------------------------------- kernels -----------------------------------

def _dark_kernel(x_ref, o_ref, *, ksize):
    # x_ref: (1, C, H, W) one batch element; o_ref: (1, 1, H, W)
    o_ref[0, 0] = _dark_map_block(x_ref[0], ksize).astype(o_ref.dtype)


def _dark_pair_loss_kernel(r_ref, f_ref, sse_ref, *, ksize):
    # Fused real+fake dark maps + in-kernel squared-error reduction:
    # only a (1, 1, 1) f32 partial sum leaves the chip per image.
    dr = _dark_map_block(r_ref[0], ksize)
    df = _dark_map_block(f_ref[0], ksize)
    d = dr - df
    sse_ref[0] = jnp.sum(d * d, keepdims=True)


# -------------------------------- wrappers ------------------------------------

def dark_channel(x, kernel_size=15):
    """Pallas version of DarkChannelLoss.forward: (N,C,H,W) -> (N,1,H,W)."""
    N, C, H, W = x.shape
    pad = (kernel_size - 1) // 2
    assert kernel_size % 2 == 1, "kernel_size must be odd (centered window)"
    assert pad < H and pad < W, "ReflectionPad2d requires pad < spatial size"
    kern = functools.partial(_dark_kernel, ksize=kernel_size)
    return pl.pallas_call(
        kern,
        out_shape=jax.ShapeDtypeStruct((N, 1, H, W), x.dtype),
        grid=(N,),
        in_specs=[pl.BlockSpec((1, C, H, W), lambda n: (n, 0, 0, 0))],
        out_specs=pl.BlockSpec((1, 1, H, W), lambda n: (n, 0, 0, 0)),
        compiler_params=pltpu.CompilerParams(
            dimension_semantics=("parallel",),
            vmem_limit_bytes=64 * 1024 * 1024),
    )(x)


def dark_channel_loss(real, fake, kernel_size=15):
    """Pallas version of DarkChannelLoss.__call__(real, fake) -> scalar MSE."""
    assert real.shape == fake.shape
    N, C, H, W = real.shape
    pad = (kernel_size - 1) // 2
    assert kernel_size % 2 == 1, "kernel_size must be odd (centered window)"
    assert pad < H and pad < W, "ReflectionPad2d requires pad < spatial size"
    kern = functools.partial(_dark_pair_loss_kernel, ksize=kernel_size)
    spec_in = pl.BlockSpec((1, C, H, W), lambda n: (n, 0, 0, 0))
    sse = pl.pallas_call(
        kern,
        out_shape=jax.ShapeDtypeStruct((N, 1, 1), jnp.float32),
        grid=(N,),
        in_specs=[spec_in, spec_in],
        out_specs=pl.BlockSpec((1, 1, 1), lambda n: (n, 0, 0)),
        compiler_params=pltpu.CompilerParams(
            dimension_semantics=("parallel",),
            vmem_limit_bytes=64 * 1024 * 1024),
    )(real, fake)
    # Tiny (N,1,1) partial sums -> finish the mean in plain JAX.
    return jnp.sum(sse) / (N * H * W)


# ----------------------------- pure-JAX reference -----------------------------

def dark_channel_reference(x, kernel_size=15):
    pad = (kernel_size - 1) // 2
    x = (x.astype(jnp.float32) + 1.0) / 2.0
    xm = jnp.min(x, axis=1, keepdims=True)                        # (N,1,H,W)
    xp = jnp.pad(xm, ((0, 0), (0, 0), (pad, pad), (pad, pad)), mode="reflect")
    pooled = jax.lax.reduce_window(
        xp, jnp.array(jnp.inf, dtype=jnp.float32), jax.lax.min,
        window_dimensions=(1, 1, kernel_size, kernel_size),
        window_strides=(1, 1, 1, 1), padding="VALID")
    return jnp.clip(pooled, 0.0, 0.1)


def dark_channel_loss_reference(real, fake, kernel_size=15):
    dr = dark_channel_reference(real, kernel_size)
    df = dark_channel_reference(fake, kernel_size)
    return jnp.mean((dr - df) ** 2)


if __name__ == "__main__":
    # Small RGB-like images; W = 128 keeps the lane axis native.
    N, C, H, W = 2, 3, 32, 128
    key = jax.random.PRNGKey(0)
    k_real, k_fake = jax.random.split(key)
    real = jax.random.uniform(k_real, (N, C, H, W), jnp.float32, -1.0, 1.0)
    fake = jax.random.uniform(k_fake, (N, C, H, W), jnp.float32, -1.0, 1.0)

    # forward(): dark-channel map
    dm = jax.block_until_ready(dark_channel(real))
    dm_ref = jax.block_until_ready(dark_channel_reference(real))
    assert dm.shape == (N, 1, H, W), dm.shape
    assert jnp.allclose(dm, dm_ref, atol=1e-6, rtol=1e-6), \
        float(jnp.max(jnp.abs(dm - dm_ref)))

    # __call__(): MSE between dark maps (fused reduction inside the kernel)
    loss = jax.block_until_ready(dark_channel_loss(real, fake))
    loss_ref = jax.block_until_ready(dark_channel_loss_reference(real, fake))
    assert jnp.allclose(loss, loss_ref, atol=1e-6, rtol=1e-6), \
        (float(loss), float(loss_ref))

    print("KERNEL_OK")
</pallas_src>

<mosaic_0001>
module attributes {stable_mosaic.version = 11 : i64} {
  func.func @_dark_kernel(%arg0: i32, %arg1: memref<1x3x32x128xf32, #tpu.memory_space<vmem>>, %arg2: memref<1x1x32x128xf32, #tpu.memory_space<vmem>>) attributes {dimension_semantics = [#tpu.dimension_semantics<parallel>], iteration_bounds = array<i64: 2>, scalar_prefetch = 0 : i64, scratch_operands = 0 : i64, tpu.core_type = #tpu.core_type<tc>, window_params = [{transform_indices = @transform_0, window_bounds = array<i64: 1, 3, 32, 128>}, {transform_indices = @transform_1, window_bounds = array<i64: 1, 1, 32, 128>}]} {
    %c0 = arith.constant 0 : index
    %c0_0 = arith.constant 0 : index
    %c0_1 = arith.constant 0 : index
    %c0_2 = arith.constant 0 : index
    %0 = vector.load %arg1[%c0, %c0_0, %c0_1, %c0_2] : memref<1x3x32x128xf32, #tpu.memory_space<vmem>>, vector<1x3x32x128xf32>
    %1 = vector.shape_cast %0 : vector<1x3x32x128xf32> to vector<3x32x128xf32>
    %cst = arith.constant dense<0x7F800000> : vector<32x128xf32>
    %2 = vector.multi_reduction <minimumf>, %1, %cst [0] : vector<3x32x128xf32> to vector<32x128xf32>
    %3 = tpu.iota {dimensions = array<i32: 0>} : vector<32x128xi32>
    %c31_i32 = arith.constant 31 : i32
    %4 = tpu.dynamic_rotate %2 by %c31_i32 dim 0 : vector<32x128xf32>, i32 -> vector<32x128xf32>
    %c31_i32_3 = arith.constant 31 : i32
    %5 = vector.broadcast %c31_i32_3 : i32 to vector<32x128xi32>
    %6 = arith.cmpi slt, %3, %5 : vector<32x128xi32>
    %cst_4 = arith.constant 0x7F800000 : f32
    %7 = vector.broadcast %cst_4 : f32 to vector<32x128xf32>
    %8 = arith.select %6, %4, %7 : vector<32x128xi1>, vector<32x128xf32>
    %9 = arith.minimumf %2, %8 : vector<32x128xf32>
    %c30_i32 = arith.constant 30 : i32
    %10 = tpu.dynamic_rotate %9 by %c30_i32 dim 0 : vector<32x128xf32>, i32 -> vector<32x128xf32>
    %c30_i32_5 = arith.constant 30 : i32
    %11 = vector.broadcast %c30_i32_5 : i32 to vector<32x128xi32>
    %12 = arith.cmpi slt, %3, %11 : vector<32x128xi32>
    %cst_6 = arith.constant 0x7F800000 : f32
    %13 = vector.broadcast %cst_6 : f32 to vector<32x128xf32>
    %14 = arith.select %12, %10, %13 : vector<32x128xi1>, vector<32x128xf32>
    %15 = arith.minimumf %9, %14 : vector<32x128xf32>
    %c28_i32 = arith.constant 28 : i32
    %16 = tpu.dynamic_rotate %15 by %c28_i32 dim 0 : vector<32x128xf32>, i32 -> vector<32x128xf32>
    %c28_i32_7 = arith.constant 28 : i32
    %17 = vector.broadcast %c28_i32_7 : i32 to vector<32x128xi32>
    %18 = arith.cmpi slt, %3, %17 : vector<32x128xi32>
    %cst_8 = arith.constant 0x7F800000 : f32
    %19 = vector.broadcast %cst_8 : f32 to vector<32x128xf32>
    %20 = arith.select %18, %16, %19 : vector<32x128xi1>, vector<32x128xf32>
    %21 = arith.minimumf %15, %20 : vector<32x128xf32>
    %c1_i32 = arith.constant 1 : i32
    %22 = tpu.dynamic_rotate %2 by %c1_i32 dim 0 : vector<32x128xf32>, i32 -> vector<32x128xf32>
    %c1_i32_9 = arith.constant 1 : i32
    %23 = vector.broadcast %c1_i32_9 : i32 to vector<32x128xi32>
    %24 = arith.cmpi sge, %3, %23 : vector<32x128xi32>
    %cst_10 = arith.constant 0x7F800000 : f32
    %25 = vector.broadcast %cst_10 : f32 to vector<32x128xf32>
    %26 = arith.select %24, %22, %25 : vector<32x128xi1>, vector<32x128xf32>
    %c1_i32_11 = arith.constant 1 : i32
    %27 = tpu.dynamic_rotate %26 by %c1_i32_11 dim 0 : vector<32x128xf32>, i32 -> vector<32x128xf32>
    %c1_i32_12 = arith.constant 1 : i32
    %28 = vector.broadcast %c1_i32_12 : i32 to vector<32x128xi32>
    %29 = arith.cmpi sge, %3, %28 : vector<32x128xi32>
    %cst_13 = arith.constant 0x7F800000 : f32
    %30 = vector.broadcast %cst_13 : f32 to vector<32x128xf32>
    %31 = arith.select %29, %27, %30 : vector<32x128xi1>, vector<32x128xf32>
    %32 = arith.minimumf %26, %31 : vector<32x128xf32>
    %c2_i32 = arith.constant 2 : i32
    %33 = tpu.dynamic_rotate %32 by %c2_i32 dim 0 : vector<32x128xf32>, i32 -> vector<32x128xf32>
    %c2_i32_14 = arith.constant 2 : i32
    %34 = vector.broadcast %c2_i32_14 : i32 to vector<32x128xi32>
    %35 = arith.cmpi sge, %3, %34 : vector<32x128xi32>
    %cst_15 = arith.constant 0x7F800000 : f32
    %36 = vector.broadcast %cst_15 : f32 to vector<32x128xf32>
    %37 = arith.select %35, %33, %36 : vector<32x128xi1>, vector<32x128xf32>
    %38 = arith.minimumf %32, %37 : vector<32x128xf32>
    %c3_i32 = arith.constant 3 : i32
    %39 = tpu.dynamic_rotate %38 by %c3_i32 dim 0 : vector<32x128xf32>, i32 -> vector<32x128xf32>
    %c3_i32_16 = arith.constant 3 : i32
    %40 = vector.broadcast %c3_i32_16 : i32 to vector<32x128xi32>
    %41 = arith.cmpi sge, %3, %40 : vector<32x128xi32>
    %cst_17 = arith.constant 0x7F800000 : f32
    %42 = vector.broadcast %cst_17 : f32 to vector<32x128xf32>
    %43 = arith.select %41, %39, %42 : vector<32x128xi1>, vector<32x128xf32>
    %44 = arith.minimumf %38, %43 : vector<32x128xf32>
    %45 = arith.minimumf %21, %44 : vector<32x128xf32>
    %46 = tpu.iota {dimensions = array<i32: 1>} : vector<32x128xi32>
    %c127_i32 = arith.constant 127 : i32
    %47 = tpu.dynamic_rotate %45 by %c127_i32 dim 1 : vector<32x128xf32>, i32 -> vector<32x128xf32>
    %c127_i32_18 = arith.constant 127 : i32
    %48 = vector.broadcast %c127_i32_18 : i32 to vector<32x128xi32>
    %49 = arith.cmpi slt, %46, %48 : vector<32x128xi32>
    %cst_19 = arith.constant 0x7F800000 : f32
    %50 = vector.broadcast %cst_19 : f32 to vector<32x128xf32>
    %51 = arith.select %49, %47, %50 : vector<32x128xi1>, vector<32x128xf32>
    %52 = arith.minimumf %45, %51 : vector<32x128xf32>
    %c126_i32 = arith.constant 126 : i32
    %53 = tpu.dynamic_rotate %52 by %c126_i32 dim 1 : vector<32x128xf32>, i32 -> vector<32x128xf32>
    %c126_i32_20 = arith.constant 126 : i32
    %54 = vector.broadcast %c126_i32_20 : i32 to vector<32x128xi32>
    %55 = arith.cmpi slt, %46, %54 : vector<32x128xi32>
    %cst_21 = arith.constant 0x7F800000 : f32
    %56 = vector.broadcast %cst_21 : f32 to vector<32x128xf32>
    %57 = arith.select %55, %53, %56 : vector<32x128xi1>, vector<32x128xf32>
    %58 = arith.minimumf %52, %57 : vector<32x128xf32>
    %c124_i32 = arith.constant 124 : i32
    %59 = tpu.dynamic_rotate %58 by %c124_i32 dim 1 : vector<32x128xf32>, i32 -> vector<32x128xf32>
    %c124_i32_22 = arith.constant 124 : i32
    %60 = vector.broadcast %c124_i32_22 : i32 to vector<32x128xi32>
    %61 = arith.cmpi slt, %46, %60 : vector<32x128xi32>
    %cst_23 = arith.constant 0x7F800000 : f32
    %62 = vector.broadcast %cst_23 : f32 to vector<32x128xf32>
    %63 = arith.select %61, %59, %62 : vector<32x128xi1>, vector<32x128xf32>
    %64 = arith.minimumf %58, %63 : vector<32x128xf32>
    %c1_i32_24 = arith.constant 1 : i32
    %65 = tpu.dynamic_rotate %45 by %c1_i32_24 dim 1 : vector<32x128xf32>, i32 -> vector<32x128xf32>
    %c1_i32_25 = arith.constant 1 : i32
    %66 = vector.broadcast %c1_i32_25 : i32 to vector<32x128xi32>
    %67 = arith.cmpi sge, %46, %66 : vector<32x128xi32>
    %cst_26 = arith.constant 0x7F800000 : f32
    %68 = vector.broadcast %cst_26 : f32 to vector<32x128xf32>
    %69 = arith.select %67, %65, %68 : vector<32x128xi1>, vector<32x128xf32>
    %c1_i32_27 = arith.constant 1 : i32
    %70 = tpu.dynamic_rotate %69 by %c1_i32_27 dim 1 : vector<32x128xf32>, i32 -> vector<32x128xf32>
    %c1_i32_28 = arith.constant 1 : i32
    %71 = vector.broadcast %c1_i32_28 : i32 to vector<32x128xi32>
    %72 = arith.cmpi sge, %46, %71 : vector<32x128xi32>
    %cst_29 = arith.constant 0x7F800000 : f32
    %73 = vector.broadcast %cst_29 : f32 to vector<32x128xf32>
    %74 = arith.select %72, %70, %73 : vector<32x128xi1>, vector<32x128xf32>
    %75 = arith.minimumf %69, %74 : vector<32x128xf32>
    %c2_i32_30 = arith.constant 2 : i32
    %76 = tpu.dynamic_rotate %75 by %c2_i32_30 dim 1 : vector<32x128xf32>, i32 -> vector<32x128xf32>
    %c2_i32_31 = arith.constant 2 : i32
    %77 = vector.broadcast %c2_i32_31 : i32 to vector<32x128xi32>
    %78 = arith.cmpi sge, %46, %77 : vector<32x128xi32>
    %cst_32 = arith.constant 0x7F800000 : f32
    %79 = vector.broadcast %cst_32 : f32 to vector<32x128xf32>
    %80 = arith.select %78, %76, %79 : vector<32x128xi1>, vector<32x128xf32>
    %81 = arith.minimumf %75, %80 : vector<32x128xf32>
    %c3_i32_33 = arith.constant 3 : i32
    %82 = tpu.dynamic_rotate %81 by %c3_i32_33 dim 1 : vector<32x128xf32>, i32 -> vector<32x128xf32>
    %c3_i32_34 = arith.constant 3 : i32
    %83 = vector.broadcast %c3_i32_34 : i32 to vector<32x128xi32>
    %84 = arith.cmpi sge, %46, %83 : vector<32x128xi32>
    %cst_35 = arith.constant 0x7F800000 : f32
    %85 = vector.broadcast %cst_35 : f32 to vector<32x128xf32>
    %86 = arith.select %84, %82, %85 : vector<32x128xi1>, vector<32x128xf32>
    %87 = arith.minimumf %81, %86 : vector<32x128xf32>
    %88 = arith.minimumf %64, %87 : vector<32x128xf32>
    %cst_36 = arith.constant 1.000000e+00 : f32
    %89 = vector.broadcast %cst_36 : f32 to vector<32x128xf32>
    %90 = arith.addf %88, %89 : vector<32x128xf32>
    %cst_37 = arith.constant 5.000000e-01 : f32
    %91 = vector.broadcast %cst_37 : f32 to vector<32x128xf32>
    %92 = arith.mulf %90, %91 : vector<32x128xf32>
    %cst_38 = arith.constant 0.000000e+00 : f32
    %cst_39 = arith.constant 1.000000e-01 : f32
    %93 = vector.broadcast %cst_38 : f32 to vector<32x128xf32>
    %94 = arith.maximumf %93, %92 : vector<32x128xf32>
    %95 = vector.broadcast %cst_39 : f32 to vector<32x128xf32>
    %96 = arith.minimumf %95, %94 : vector<32x128xf32>
    %c0_40 = arith.constant 0 : index
    %c0_41 = arith.constant 0 : index
    %c0_42 = arith.constant 0 : index
    %c0_43 = arith.constant 0 : index
    %97 = vector.load %arg2[%c0_40, %c0_41, %c0_42, %c0_43] : memref<1x1x32x128xf32, #tpu.memory_space<vmem>>, vector<1x1x32x128xf32>
    %98 = vector.shape_cast %97 : vector<1x1x32x128xf32> to vector<32x128xf32>
    %99 = vector.shape_cast %96 : vector<32x128xf32> to vector<1x1x32x128xf32>
    tpu.vector_store %arg2[%c0_40, %c0_41, %c0_42, %c0_43], %99 {strides = array<i32>} : memref<1x1x32x128xf32, #tpu.memory_space<vmem>>, vector<1x1x32x128xf32>,
    return
  }
  func.func @transform_0(%arg0: i32) -> (i32, i32, i32, i32) {
    %c0_i32 = arith.constant 0 : i32
    %c0_i32_0 = arith.constant 0 : i32
    %c0_i32_1 = arith.constant 0 : i32
    %c0_i32_2 = arith.constant 0 : i32
    return %arg0, %c0_i32, %c0_i32_0, %c0_i32_1 : i32, i32, i32, i32
  }
  func.func @transform_1(%arg0: i32) -> (i32, i32, i32, i32) {
    %c0_i32 = arith.constant 0 : i32
    %c0_i32_0 = arith.constant 0 : i32
    %c0_i32_1 = arith.constant 0 : i32
    %c0_i32_2 = arith.constant 0 : i32
    return %arg0, %c0_i32, %c0_i32_0, %c0_i32_1 : i32, i32, i32, i32
  }
}

</mosaic_0001>

<llo_original>
// kernel: tpu_custom_call.1
$region0: #{tpu_custom_call.1}
  #allocation0 [shape = 'u32[]', space=smem, size = 0x4, offset = 0x4, fixed_abs, tag = 'smem constant byte address 0x4 - core index']
  #allocation1 [shape = 'u32[72,128]{1,0:T(1,128)}', space=vmem, size = 0x9000, scoped, tag = 'internal scratch']
  %s0 = inlined_call_operand.hbm [shape: f32[2,3,32,128], index: 0, kind: input, shape index: {}]
  %s1 = inlined_call_operand.hbm [shape: f32[2,1,32,128], index: 1, kind: output, shape index: {}]
  %s2 = sld [smem:[#allocation0]]
  $region41: #{tpu_custom_call.1} parent=0
    _
  %s4 = ssub.s32 1, %s2
  %s5 = scalar_select 0, %s4, %s2
  $region1: #{tpu_custom_call.1} parent=0
    #allocation2 [shape = 'u8[98304]{0}', space=vmem, size = 0x18000, scoped, tag = 'input window, operand 0']
    #allocation3 [shape = 's32[2]{0}', space=sflag, size = 0x8, scoped, tag = 'scoped memory for tpu_custom_call.1']
    #allocation4 [shape = 's32[2]{0}', space=sflag, size = 0x8, scoped, tag = 'scoped memory for tpu_custom_call.1']
    #allocation5 [shape = 'u8[32768]{0}', space=vmem, size = 0x8000, scoped, tag = 'output window, operand 0']
    %6 = vsyncpa [#allocation3], 0
    %s7 = scalar_lea.sflag [#allocation3], 1
    %8 = vsyncpa %s7, 0
    %9 = vsyncpa [#allocation4], 0
    %s10 = scalar_lea.sflag [#allocation4], 1
    %11 = vsyncpa %s10, 0
    loop: start=0, step=1, limit=4
    $region2: #{tpu_custom_call.1} parent=1 // loop_pre_header
      _
    $region3: #{tpu_custom_call.1} parent=1 // loop_header
      %s13 = sphi 0, %s17
      %p14 = scmp.ge.s32.totalorder %s13, 4
      %s23 = sphi 0, %s25
      %s26 = sphi 0, %s23
      %s27 = sphi 0, %s26
      %s43 = sphi 0, %s27
      %s49 = sphi 0, %s51
      %s52 = sphi 0, %s49
      %s53 = sphi 0, %s52
      %s69 = sphi 0, %s53
    $region4: #{tpu_custom_call.1} parent=1 // loop_header_branch
      %16 = sbr.rel (%p14) target = $region8
    $region5: #{tpu_custom_call.1} parent=1 // loop_body
      %s18 = ssub.s32 %s13, 1
      %s19 = ssub.s32 %s13, 2
      %s20 = sadd.s32 %s13, 1
      %s21 = ssub.s32 %s13, %s20
      %p22 = scmp.eq.s32.totalorder %s21, 0
      %s24 = sadd.s32 %s23, 1
      %s25 = scalar_select %p22, %s23, %s24
      %p28 = pneg %p22
      %p29 = scmp.eq.s32.totalorder %s13, 1
      %p30 = por %p28, %p29
      %p31 = scmp.ne.s32.totalorder %s23, %s26
      %p32 = scmp.eq.s32.totalorder %s13, 0
      %p33 = por %p31, %p32
      %p34 = scmp.ne.s32.totalorder %s23, %s26
      %p35 = scmp.eq.s32.totalorder %s18, 1
      %p36 = por %p34, %p35
      %p37 = scmp.ne.s32.totalorder %s26, %s27
      %p38 = scmp.eq.s32.totalorder %s18, 0
      %p39 = por %p37, %p38
      %p40 = scmp.ne.s32.totalorder %s26, %s27
      %p41 = scmp.eq.s32.totalorder %s19, 1
      %p42 = por %p40, %p41
      %p44 = scmp.ne.s32.totalorder %s27, %s43
      %p45 = scmp.eq.s32.totalorder %s19, 0
      %p46 = por %p44, %p45
      %s47 = ssub.s32 %s13, %s20
      %p48 = scmp.eq.s32.totalorder %s47, 0
      %s50 = sadd.s32 %s49, 1
      %s51 = scalar_select %p48, %s49, %s50
      %p54 = pneg %p48
      %p55 = scmp.eq.s32.totalorder %s13, 1
      %p56 = por %p54, %p55
      %p57 = scmp.ne.s32.totalorder %s49, %s52
      %p58 = scmp.eq.s32.totalorder %s13, 0
      %p59 = por %p57, %p58
      %p60 = scmp.ne.s32.totalorder %s49, %s52
      %p61 = scmp.eq.s32.totalorder %s18, 1
      %p62 = por %p60, %p61
      %p63 = scmp.ne.s32.totalorder %s52, %s53
      %p64 = scmp.eq.s32.totalorder %s18, 0
      %p65 = por %p63, %p64
      %p66 = scmp.ne.s32.totalorder %s52, %s53
      %p67 = scmp.eq.s32.totalorder %s19, 1
      %p68 = por %p66, %p67
      %p70 = scmp.ne.s32.totalorder %s53, %s69
      %p71 = scmp.eq.s32.totalorder %s19, 0
      %p72 = por %p70, %p71
      %p73 = scmp.le.s32.totalorder 1, %s13
      %p74 = scmp.lt.s32.totalorder %s13, 3
      %p75 = pnand %p73, %p74
      %p76 = pneg %p75
      // Predicated region
      $region9: #{tpu_custom_call.1} parent=5 // pred_check
        _
      $region10: #{tpu_custom_call.1} parent=5 // pred_check_branch
        %78 = sbr.rel (%p75) target = $region12
      $region11: #{tpu_custom_call.1} parent=5 // pred_region
        %s79 = ssub.s32 %s13, 1
      $region12: #{tpu_custom_call.1} parent=5 // pred_fallthru
        _
      %p80 = scmp.lt.s32.totalorder %s13, 2
      // Predicated region
      $region13: #{tpu_custom_call.1} parent=5 // pred_check
        %p81 = pneg %p80
      $region14: #{tpu_custom_call.1} parent=5 // pred_check_branch
        %83 = sbr.rel (%p81) target = $region16
      $region15: #{tpu_custom_call.1} parent=5 // pred_region
        // Predicated region
        $region17: #{tpu_custom_call.1} parent=15 // pred_check
          %p84 = pneg %p33
        $region18: #{tpu_custom_call.1} parent=15 // pred_check_branch
          %86 = sbr.rel (%p84) target = $region20
        $region19: #{tpu_custom_call.1} parent=15 // pred_region
          %s87 = sand.u32 %s23, 1
          %s88 = scalar_lea.sflag [#allocation3], %s87
          %s89 = sand.u32 %s23, 1
          %s90 = smul.addr %s89, 96
          %s91 = scalar_lea.vmem [#allocation2], %s90
          %93 = vsyncadd %s88, 0
          %s94 = smul.addr %s13, 12
          %s95 = smul.addr %s94, 8
          %s96 = scalar_lea.hbm %s0, %s95
          %s97 = sshll.u32 %s96, 4
          %s98 = int_to_ptr.hbm [resolvable:$true] %s97
          %s99 = sshll.u32 %s91, 4
          %s100 = int_to_ptr.vmem [resolvable:$true] %s99
          %105 = dma.hbm_to_vmem [thread:$0]  %s98, 1536, %s100, %s88, 128, 128, 8
        $region20: #{tpu_custom_call.1} parent=15 // pred_fallthru
          _
      $region16: #{tpu_custom_call.1} parent=5 // pred_fallthru
        _
      %p106 = scmp.le.s32.totalorder 1, %s13
      %p107 = scmp.lt.s32.totalorder %s13, 3
      %p108 = pnand %p106, %p107
      %p109 = pneg %p108
      // Predicated region
      $region21: #{tpu_custom_call.1} parent=5 // pred_check
        _
      $region22: #{tpu_custom_call.1} parent=5 // pred_check_branch
        %111 = sbr.rel (%p108) target = $region24
      $region23: #{tpu_custom_call.1} parent=5 // pred_region
        %s112 = ssub.s32 %s13, 1
        %s113 = sand.u32 %s26, 1
        %s114 = scalar_lea.sflag [#allocation3], %s113
        %s115 = sand.u32 %s26, 1
        %s116 = smul.addr %s115, 96
        %s117 = scalar_lea.vmem [#allocation2], %s116
        // Predicated region
        $region25: #{tpu_custom_call.1} parent=23 // pred_check
          %p118 = pneg %p39
        $region26: #{tpu_custom_call.1} parent=23 // pred_check_branch
          %120 = sbr.rel (%p118) target = $region28
        $region27: #{tpu_custom_call.1} parent=23 // pred_region
          %122 = dma.done %s114, 1536
        $region28: #{tpu_custom_call.1} parent=23 // pred_fallthru
          _
        %s123 = sand.u32 %s26, 1
        %s124 = scalar_lea.sflag [#allocation3], %s123
        %s125 = sand.u32 %s26, 1
        %s126 = smul.addr %s125, 96
        %s127 = scalar_lea.vmem [#allocation2], %s126
        %p128 = pneg %p39
        %p129 = pneg %p36
        %p130 = pneg %p65
        %p131 = pneg %p62
        %s132 = sand.u32 %s52, 1
        %s133 = scalar_lea.sflag [#allocation4], %s132
        %s134 = sand.u32 %s52, 1
        %s135 = smul.addr %s134, 32
        %s136 = scalar_lea.vmem [#allocation5], %s135
        %v137 = vld [vmem:[%s117] sm:$0xff]
        %v138 = vld [vmem:[%s117 + $0x8] sm:$0xff]
        %v139 = vld [vmem:[%s117 + $0x10] sm:$0xff]
        %v140 = vld [vmem:[%s117 + $0x18] sm:$0xff]
        %v141 = vld [vmem:[%s117 + $0x20] sm:$0xff]
        %v142 = vld [vmem:[%s117 + $0x28] sm:$0xff]
        %v143 = vld [vmem:[%s117 + $0x30] sm:$0xff]
        %v144 = vld [vmem:[%s117 + $0x38] sm:$0xff]
        %v145 = vld [vmem:[%s117 + $0x40] sm:$0xff]
        %v146 = vld [vmem:[%s117 + $0x48] sm:$0xff]
        %v147 = vld [vmem:[%s117 + $0x50] sm:$0xff]
        %v148 = vld [vmem:[%s117 + $0x58] sm:$0xff]
        %v149 = vmin.f32 %v137, %v141
        %v150 = vmin.f32 %v149, %v145
        %v151 = vmin.f32 %v138, %v142
        %v152 = vmin.f32 %v151, %v146
        %v153 = vmin.f32 %v139, %v143
        %v154 = vmin.f32 %v153, %v147
        %v155 = vmin.f32 %v140, %v144
        %v156 = vmin.f32 %v155, %v148
        %v157 = vlaneseq
        %v158 = vshrl.u32 %v157, 7
        %v159 = vadd.s32 %v158, 8
        %v160 = vadd.s32 %v158, 16
        %v161 = vadd.s32 %v158, 24
        %v162 = vrot.slane %v150, 1
        %v163 = vrot.slane %v152, 1
        %v164 = vrot.slane %v154, 1
        %v165 = vrot.slane %v156, 1
        %vm166 = vcmp.lt.s32.totalorder %v158, 7
        %v167 = vsel %vm166, %v164, %v165
        %v168 = vsel %vm166, %v163, %v164
        %v169 = vsel %vm166, %v162, %v163
        %v170 = vsel %vm166, %v165, %v162
        %vm171 = vcmp.lt.s32.totalorder %v158, 31
        %vm172 = vcmp.lt.s32.totalorder %v159, 31
        %vm173 = vcmp.lt.s32.totalorder %v160, 31
        %vm174 = vcmp.lt.s32.totalorder %v161, 31
        %v175 = vsel %vm171, %v169, inf
        %v176 = vsel %vm172, %v168, inf
        %v177 = vsel %vm173, %v167, inf
        %v178 = vsel %vm174, %v170, inf
        %v179 = vmin.f32 %v150, %v175
        %v180 = vmin.f32 %v152, %v176
        %v181 = vmin.f32 %v154, %v177
        %v182 = vmin.f32 %v156, %v178
        %v183 = vrot.slane %v179, 2
        %v184 = vrot.slane %v180, 2
        %v185 = vrot.slane %v181, 2
        %v186 = vrot.slane %v182, 2
        %vm187 = vcmp.lt.s32.totalorder %v158, 6
        %v188 = vsel %vm187, %v185, %v186
        %v189 = vsel %vm187, %v184, %v185
        %v190 = vsel %vm187, %v183, %v184
        %v191 = vsel %vm187, %v186, %v183
        %vm192 = vcmp.lt.s32.totalorder %v158, 30
        %vm193 = vcmp.lt.s32.totalorder %v159, 30
        %vm194 = vcmp.lt.s32.totalorder %v160, 30
        %vm195 = vcmp.lt.s32.totalorder %v161, 30
        %v196 = vsel %vm192, %v190, inf
        %v197 = vsel %vm193, %v189, inf
        %v198 = vsel %vm194, %v188, inf
        %v199 = vsel %vm195, %v191, inf
        %v200 = vmin.f32 %v179, %v196
        %v201 = vmin.f32 %v180, %v197
        %v202 = vmin.f32 %v181, %v198
        %v203 = vmin.f32 %v182, %v199
        %v204 = vrot.slane %v200, 4
        %v205 = vrot.slane %v201, 4
        %v206 = vrot.slane %v202, 4
        %v207 = vrot.slane %v203, 4
        %vm208 = vcmp.lt.s32.totalorder %v158, 4
        %v209 = vsel %vm208, %v206, %v207
        %v210 = vsel %vm208, %v205, %v206
        %v211 = vsel %vm208, %v204, %v205
        %v212 = vsel %vm208, %v207, %v204
        %vm213 = vcmp.lt.s32.totalorder %v158, 28
        %vm214 = vcmp.lt.s32.totalorder %v159, 28
        %vm215 = vcmp.lt.s32.totalorder %v160, 28
        %vm216 = vcmp.lt.s32.totalorder %v161, 28
        %v217 = vsel %vm213, %v211, inf
        %v218 = vsel %vm214, %v210, inf
        %v219 = vsel %vm215, %v209, inf
        %v220 = vsel %vm216, %v212, inf
        %v221 = vmin.f32 %v200, %v217
        %v222 = vmin.f32 %v201, %v218
        %v223 = vmin.f32 %v202, %v219
        %v224 = vmin.f32 %v203, %v220
        %v225 = vrot.slane %v150, 7
        %v226 = vrot.slane %v152, 7
        %v227 = vrot.slane %v154, 7
        %v228 = vrot.slane %v156, 7
        %vm229 = vcmp.lt.s32.totalorder %v158, 1
        %v230 = vsel %vm229, %v227, %v228
        %v231 = vsel %vm229, %v226, %v227
        %v232 = vsel %vm229, %v225, %v226
        %v233 = vsel %vm229, %v228, %v225
        %vm234 = vcmp.ge.s32.totalorder %v158, 1
        %vm235 = vcmp.ge.s32.totalorder %v159, 1
        %vm236 = vcmp.ge.s32.totalorder %v160, 1
        %vm237 = vcmp.ge.s32.totalorder %v161, 1
        %v238 = vsel %vm234, %v233, inf
        %v239 = vsel %vm235, %v232, inf
        %v240 = vsel %vm236, %v231, inf
        %v241 = vsel %vm237, %v230, inf
        %v242 = vrot.slane %v238, 7
        %v243 = vrot.slane %v239, 7
        %v244 = vrot.slane %v240, 7
        %v245 = vrot.slane %v241, 7
        %v246 = vsel %vm229, %v244, %v245
        %v247 = vsel %vm229, %v243, %v244
        %v248 = vsel %vm229, %v242, %v243
        %v249 = vsel %vm229, %v245, %v242
        %v250 = vsel %vm234, %v249, inf
        %v251 = vsel %vm235, %v248, inf
        %v252 = vsel %vm236, %v247, inf
        %v253 = vsel %vm237, %v246, inf
        %v254 = vmin.f32 %v238, %v250
        %v255 = vmin.f32 %v239, %v251
        %v256 = vmin.f32 %v240, %v252
        %v257 = vmin.f32 %v241, %v253
        %v258 = vrot.slane %v254, 6
        %v259 = vrot.slane %v255, 6
        %v260 = vrot.slane %v256, 6
        %v261 = vrot.slane %v257, 6
        %vm262 = vcmp.lt.s32.totalorder %v158, 2
        %v263 = vsel %vm262, %v260, %v261
        %v264 = vsel %vm262, %v259, %v260
        %v265 = vsel %vm262, %v258, %v259
        %v266 = vsel %vm262, %v261, %v258
        %vm267 = vcmp.ge.s32.totalorder %v158, 2
        %vm268 = vcmp.ge.s32.totalorder %v159, 2
        %vm269 = vcmp.ge.s32.totalorder %v160, 2
        %vm270 = vcmp.ge.s32.totalorder %v161, 2
        %v271 = vsel %vm267, %v266, inf
        %v272 = vsel %vm268, %v265, inf
        %v273 = vsel %vm269, %v264, inf
        %v274 = vsel %vm270, %v263, inf
        %v275 = vmin.f32 %v254, %v271
        %v276 = vmin.f32 %v255, %v272
        %v277 = vmin.f32 %v256, %v273
        %v278 = vmin.f32 %v257, %v274
        %v279 = vrot.slane %v275, 5
        %v280 = vrot.slane %v276, 5
        %v281 = vrot.slane %v277, 5
        %v282 = vrot.slane %v278, 5
        %vm283 = vcmp.lt.s32.totalorder %v158, 3
        %v284 = vsel %vm283, %v281, %v282
        %v285 = vsel %vm283, %v280, %v281
        %v286 = vsel %vm283, %v279, %v280
        %v287 = vsel %vm283, %v282, %v279
        %vm288 = vcmp.ge.s32.totalorder %v158, 3
        %vm289 = vcmp.ge.s32.totalorder %v159, 3
        %vm290 = vcmp.ge.s32.totalorder %v160, 3
        %vm291 = vcmp.ge.s32.totalorder %v161, 3
        %v292 = vsel %vm288, %v287, inf
        %v293 = vsel %vm289, %v286, inf
        %v294 = vsel %vm290, %v285, inf
        %v295 = vsel %vm291, %v284, inf
        %v296 = vmin.f32 %v275, %v292
        %v297 = vmin.f32 %v276, %v293
        %v298 = vmin.f32 %v277, %v294
        %v299 = vmin.f32 %v278, %v295
        %v300 = vmin.f32 %v221, %v296
        %v301 = vmin.f32 %v222, %v297
        %v302 = vmin.f32 %v223, %v298
        %v303 = vmin.f32 %v224, %v299
        %v304 = vlaneseq
        %v305 = vand.u32 %v304, 127
        %306 = vrot.lane.b32.xlu0 %v300, 127
        %v307 = vpop.permute.xlu0 %306
        %308 = vrot.lane.b32.xlu0 %v301, 127
        %v309 = vpop.permute.xlu0 %308
        %310 = vrot.lane.b32.xlu0 %v302, 127
        %v311 = vpop.permute.xlu0 %310
        %312 = vrot.lane.b32.xlu0 %v303, 127
        %v313 = vpop.permute.xlu0 %312
        %vm314 = vcmp.lt.s32.totalorder %v305, 127
        %v315 = vsel %vm314, %v307, inf
        %v316 = vsel %vm314, %v309, inf
        %v317 = vsel %vm314, %v311, inf
        %v318 = vsel %vm314, %v313, inf
        %v319 = vmin.f32 %v300, %v315
        %v320 = vmin.f32 %v301, %v316
        %v321 = vmin.f32 %v302, %v317
        %v322 = vmin.f32 %v303, %v318
        %323 = vrot.lane.b32.xlu0 %v319, 126
        %v324 = vpop.permute.xlu0 %323
        %325 = vrot.lane.b32.xlu0 %v320, 126
        %v326 = vpop.permute.xlu0 %325
        %327 = vrot.lane.b32.xlu0 %v321, 126
        %v328 = vpop.permute.xlu0 %327
        %329 = vrot.lane.b32.xlu0 %v322, 126
        %v330 = vpop.permute.xlu0 %329
        %vm331 = vcmp.lt.s32.totalorder %v305, 126
        %v332 = vsel %vm331, %v324, inf
        %v333 = vsel %vm331, %v326, inf
        %v334 = vsel %vm331, %v328, inf
        %v335 = vsel %vm331, %v330, inf
        %v336 = vmin.f32 %v319, %v332
        %v337 = vmin.f32 %v320, %v333
        %v338 = vmin.f32 %v321, %v334
        %v339 = vmin.f32 %v322, %v335
        %340 = vrot.lane.b32.xlu0 %v336, 124
        %v341 = vpop.permute.xlu0 %340
        %342 = vrot.lane.b32.xlu0 %v337, 124
        %v343 = vpop.permute.xlu0 %342
        %344 = vrot.lane.b32.xlu0 %v338, 124
        %v345 = vpop.permute.xlu0 %344
        %346 = vrot.lane.b32.xlu0 %v339, 124
        %v347 = vpop.permute.xlu0 %346
        %vm348 = vcmp.lt.s32.totalorder %v305, 124
        %v349 = vsel %vm348, %v341, inf
        %v350 = vsel %vm348, %v343, inf
        %v351 = vsel %vm348, %v345, inf
        %v352 = vsel %vm348, %v347, inf
        %v353 = vmin.f32 %v336, %v349
        %v354 = vmin.f32 %v337, %v350
        %v355 = vmin.f32 %v338, %v351
        %v356 = vmin.f32 %v339, %v352
        %357 = vrot.lane.b32.xlu0 %v300, 1
        %v358 = vpop.permute.xlu0 %357
        %359 = vrot.lane.b32.xlu0 %v301, 1
        %v360 = vpop.permute.xlu0 %359
        %361 = vrot.lane.b32.xlu0 %v302, 1
        %v362 = vpop.permute.xlu0 %361
        %363 = vrot.lane.b32.xlu0 %v303, 1
        %v364 = vpop.permute.xlu0 %363
        %vm365 = vcmp.ge.s32.totalorder %v305, 1
        %v366 = vsel %vm365, %v358, inf
        %v367 = vsel %vm365, %v360, inf
        %v368 = vsel %vm365, %v362, inf
        %v369 = vsel %vm365, %v364, inf
        %370 = vrot.lane.b32.xlu0 %v366, 1
        %v371 = vpop.permute.xlu0 %370
        %372 = vrot.lane.b32.xlu0 %v367, 1
        %v373 = vpop.permute.xlu0 %372
        %374 = vrot.lane.b32.xlu0 %v368, 1
        %v375 = vpop.permute.xlu0 %374
        %376 = vrot.lane.b32.xlu0 %v369, 1
        %v377 = vpop.permute.xlu0 %376
        %v378 = vsel %vm365, %v371, inf
        %v379 = vsel %vm365, %v373, inf
        %v380 = vsel %vm365, %v375, inf
        %v381 = vsel %vm365, %v377, inf
        %v382 = vmin.f32 %v366, %v378
        %v383 = vmin.f32 %v367, %v379
        %v384 = vmin.f32 %v368, %v380
        %v385 = vmin.f32 %v369, %v381
        %386 = vrot.lane.b32.xlu0 %v382, 2
        %v387 = vpop.permute.xlu0 %386
        %388 = vrot.lane.b32.xlu0 %v383, 2
        %v389 = vpop.permute.xlu0 %388
        %390 = vrot.lane.b32.xlu0 %v384, 2
        %v391 = vpop.permute.xlu0 %390
        %392 = vrot.lane.b32.xlu0 %v385, 2
        %v393 = vpop.permute.xlu0 %392
        %vm394 = vcmp.ge.s32.totalorder %v305, 2
        %v395 = vsel %vm394, %v387, inf
        %v396 = vsel %vm394, %v389, inf
        %v397 = vsel %vm394, %v391, inf
        %v398 = vsel %vm394, %v393, inf
        %v399 = vmin.f32 %v382, %v395
        %v400 = vmin.f32 %v383, %v396
        %v401 = vmin.f32 %v384, %v397
        %v402 = vmin.f32 %v385, %v398
        %403 = vrot.lane.b32.xlu0 %v399, 3
        %v404 = vpop.permute.xlu0 %403
        %405 = vrot.lane.b32.xlu0 %v400, 3
        %v406 = vpop.permute.xlu0 %405
        %407 = vrot.lane.b32.xlu0 %v401, 3
        %v408 = vpop.permute.xlu0 %407
        %409 = vrot.lane.b32.xlu0 %v402, 3
        %v410 = vpop.permute.xlu0 %409
        %vm411 = vcmp.ge.s32.totalorder %v305, 3
        %v412 = vsel %vm411, %v404, inf
        %v413 = vsel %vm411, %v406, inf
        %v414 = vsel %vm411, %v408, inf
        %v415 = vsel %vm411, %v410, inf
        %v416 = vmin.f32 %v399, %v412
        %v417 = vmin.f32 %v400, %v413
        %v418 = vmin.f32 %v401, %v414
        %v419 = vmin.f32 %v402, %v415
        %v420 = vmin.f32 %v353, %v416
        %v421 = vmin.f32 %v354, %v417
        %v422 = vmin.f32 %v355, %v418
        %v423 = vmin.f32 %v356, %v419
        %v424 = vadd.f32 %v420, 1.0
        %v425 = vadd.f32 %v421, 1.0
        %v426 = vadd.f32 %v422, 1.0
        %v427 = vadd.f32 %v423, 1.0
        %v428 = vmul.f32 %v424, 0.5
        %v429 = vmul.f32 %v425, 0.5
        %v430 = vmul.f32 %v426, 0.5
        %v431 = vmul.f32 %v427, 0.5
        %v432 = vmax.f32 %v428, 0.0
        %v433 = vmax.f32 %v429, 0.0
        %v434 = vmax.f32 %v430, 0.0
        %v435 = vmax.f32 %v431, 0.0
        %v436 = vmin.f32 %v432, 0.1
        %v437 = vmin.f32 %v433, 0.1
        %v438 = vmin.f32 %v434, 0.1
        %v439 = vmin.f32 %v435, 0.1
        %440 = vst [vmem:[%s136] sm:$0xff] %v436
        %441 = vst [vmem:[%s136 + $0x8] sm:$0xff] %v437
        %442 = vst [vmem:[%s136 + $0x10] sm:$0xff] %v438
        %443 = vst [vmem:[%s136 + $0x18] sm:$0xff] %v439
        %s444 = sand.u32 %s52, 1
        %s445 = scalar_lea.sflag [#allocation4], %s444
        %s446 = sand.u32 %s52, 1
        %s447 = smul.addr %s446, 32
        %s448 = scalar_lea.vmem [#allocation5], %s447
        // Predicated region
        $region29: #{tpu_custom_call.1} parent=23 // pred_check
          %p449 = pneg %p62
        $region30: #{tpu_custom_call.1} parent=23 // pred_check_branch
          %451 = sbr.rel (%p449) target = $region32
        $region31: #{tpu_custom_call.1} parent=23 // pred_region
          %453 = vsyncadd %s445, 0
          %s454 = smul.addr %s18, 4
          %s455 = smul.addr %s454, 8
          %s456 = scalar_lea.hbm %s1, %s455
          %s457 = sshll.u32 %s448, 4
          %s458 = int_to_ptr.vmem [resolvable:$true] %s457
          %s459 = sshll.u32 %s456, 4
          %s460 = int_to_ptr.hbm [resolvable:$true] %s459
          %465 = dma.vmem_to_hbm [thread:$0]  %s458, 512, %s460, %s445, 128, 128, 8
        $region32: #{tpu_custom_call.1} parent=23 // pred_fallthru
          _
      $region24: #{tpu_custom_call.1} parent=5 // pred_fallthru
        _
      %p466 = scmp.le.s32.totalorder 2, %s13
      // Predicated region
      $region33: #{tpu_custom_call.1} parent=5 // pred_check
        %p467 = pneg %p466
      $region34: #{tpu_custom_call.1} parent=5 // pred_check_branch
        %469 = sbr.rel (%p467) target = $region36
      $region35: #{tpu_custom_call.1} parent=5 // pred_region
        %s470 = ssub.s32 %s13, 2
        // Predicated region
        $region37: #{tpu_custom_call.1} parent=35 // pred_check
          %p471 = pneg %p68
        $region38: #{tpu_custom_call.1} parent=35 // pred_check_branch
          %473 = sbr.rel (%p471) target = $region40
        $region39: #{tpu_custom_call.1} parent=35 // pred_region
          %s474 = sand.u32 %s53, 1
          %s475 = scalar_lea.sflag [#allocation4], %s474
          %s476 = sand.u32 %s53, 1
          %s477 = smul.addr %s476, 32
          %s478 = scalar_lea.vmem [#allocation5], %s477
          %480 = dma.done %s475, 512
        $region40: #{tpu_custom_call.1} parent=35 // pred_fallthru
          _
      $region36: #{tpu_custom_call.1} parent=5 // pred_fallthru
        _
    $region6: #{tpu_custom_call.1} parent=1 // loop_footer
      %s17 = sadd.s32 1, %s13
    $region7: #{tpu_custom_call.1} parent=1 // loop_footer_branch
      %12 = sbr.rel target = $region3
    $region8: #{tpu_custom_call.1} parent=1 // loop_exit
      _
    %481 = vsyncpa [#allocation3], 1
    %s482 = scalar_lea.sflag [#allocation3], 1
    %483 = vsyncpa %s482, 1
    %484 = vsyncpa [#allocation4], 1
    %s485 = scalar_lea.sflag [#allocation4], 1
    %486 = vsyncpa %s485, 1

</llo_original>
